<compile_context>
chip_gen: v5e
topology: v5e:2x2
jax: 0.10.0
libtpu: 0.0.40
codegen_flags: <defaults>
</compile_context>

<pallas_src>
import jax
import jax.numpy as jnp
from jax import lax
from jax.experimental import pallas as pl
from jax.experimental.pallas import tpu as pltpu


def _bits_to_uniform_kernel(bits_ref, out_ref):
    """Turn one (1, 128) row of raw uint32 bits into uniform [0, 1) float32."""
    ubits = bits_ref[...]                         # (1, 128) uint32, one sublane row
    # Mantissa-fill trick: keep 23 random mantissa bits, OR in the exponent of
    # 1.0f -> value in [1, 2), bitcast to f32, subtract 1.0 -> uniform [0, 1).
    mant = ubits >> jnp.uint32(9)
    fbits = mant | jnp.uint32(0x3F800000)
    u = lax.bitcast_convert_type(fbits, jnp.float32) - jnp.float32(1.0)
    out_ref[...] = u                              # single unmasked 128-lane store


@jax.jit
def _dummy_rand(key):
    """Generate the fused (1, 128) uniform slab and slice out p, m, y."""
    bits = jax.random.bits(key, (1, 128), dtype=jnp.uint32)
    out = pl.pallas_call(
        _bits_to_uniform_kernel,
        out_shape=jax.ShapeDtypeStruct((1, 128), jnp.float32),
        in_specs=[pl.BlockSpec(memory_space=pltpu.MemorySpace.VMEM)],
        out_specs=pl.BlockSpec(memory_space=pltpu.MemorySpace.VMEM),
    )(bits)
    row = out[0]
    return row[0:48], row[48:97], row[97:98]


def dummy_net_forward(x, slide=True, move=True, value=True, *, key=None):
    """Pallas equivalent of DummyNet.forward(x) -> (p, m, y).

    `x`, `slide`, `move`, `value` are accepted for signature parity but are
    unused, exactly like the PyTorch module.
    """
    del x, slide, move, value  # unused, matching the reference module
    if key is None:
        key = jax.random.PRNGKey(0)
    # TODO(synk): torch.rand's exact RNG stream is not reproduced (values are
    # still i.i.d. uniform [0, 1), which is all the dummy module specifies).
    return _dummy_rand(key)


if __name__ == "__main__":
    root = jax.random.PRNGKey(0)
    kx, kr = jax.random.split(root)
    # Small NCHW input consistent with a conv-style net; DummyNet ignores it.
    x = jax.random.normal(kx, (2, 4, 16, 16), dtype=jnp.float32)

    p, m, y = dummy_net_forward(x, key=kr)
    jax.block_until_ready((p, m, y))

    assert p.shape == (48,) and p.dtype == jnp.float32
    assert m.shape == (49,) and m.dtype == jnp.float32
    assert y.shape == (1,) and y.dtype == jnp.float32
    # uniform [0, 1) range check
    for t in (p, m, y):
        assert bool(jnp.all(t >= 0.0)) and bool(jnp.all(t < 1.0))

    print("KERNEL_OK")
</pallas_src>

<mosaic_0001>
module attributes {stable_mosaic.version = 11 : i64} {
  func.func @_bits_to_uniform_kernel(%arg0: memref<1x128xi32, #tpu.memory_space<vmem>>, %arg1: memref<1x128xf32, #tpu.memory_space<vmem>>) attributes {dimension_semantics = [], scalar_prefetch = 0 : i64, scratch_operands = 0 : i64, tpu.core_type = #tpu.core_type<tc>} {
    %c0 = arith.constant 0 : index
    %c0_0 = arith.constant 0 : index
    %0 = vector.load %arg0[%c0, %c0_0] : memref<1x128xi32, #tpu.memory_space<vmem>>, vector<1x128xi32>
    %c9_i32 = arith.constant 9 : i32
    %1 = vector.broadcast %c9_i32 : i32 to vector<1x128xi32>
    %2 = arith.shrui %0, %1 : vector<1x128xi32>
    %c1065353216_i32 = arith.constant 1065353216 : i32
    %3 = vector.broadcast %c1065353216_i32 : i32 to vector<1x128xi32>
    %4 = arith.ori %2, %3 : vector<1x128xi32>
    %5 = tpu.bitcast %4 : vector<1x128xi32> -> vector<1x128xf32>
    %cst = arith.constant 1.000000e+00 : f32
    %6 = vector.broadcast %cst : f32 to vector<1x128xf32>
    %7 = arith.subf %5, %6 : vector<1x128xf32>
    %c0_1 = arith.constant 0 : index
    %c0_2 = arith.constant 0 : index
    %8 = vector.load %arg1[%c0_1, %c0_2] : memref<1x128xf32, #tpu.memory_space<vmem>>, vector<1x128xf32>
    tpu.vector_store %arg1[%c0_1, %c0_2], %7 {strides = array<i32>} : memref<1x128xf32, #tpu.memory_space<vmem>>, vector<1x128xf32>,
    return
  }
}

</mosaic_0001>

<llo_original>
// kernel: _dummy_rand.1
$region0: #{_dummy_rand.1}
  #allocation0 [shape = 'u32[]', space=smem, size = 0x4, offset = 0x4, fixed_abs, tag = 'smem constant byte address 0x4 - core index']
  #allocation1 [shape = 'u32[72,128]{1,0:T(1,128)}', space=vmem, size = 0x9000, scoped, tag = 'internal scratch']
  %s0 = inlined_call_operand.vmem [shape: u32[1,128], index: 0, kind: input, shape index: {}]
  %s1 = inlined_call_operand.vmem [shape: f32[1,128], index: 1, kind: output, shape index: {}]
  %s2 = sld [smem:[#allocation0]]
  $region14: #{_dummy_rand.1} parent=0
    _
  %s4 = ssub.s32 1, %s2
  %s5 = scalar_select 0, %s4, %s2
  // Predicated region
  $region2: #{_dummy_rand.1} parent=0 // pred_check
    _
  $region3: #{_dummy_rand.1} parent=0 // pred_check_branch
    %7 = sbr.rel (0) target = $region5
  $region4: #{_dummy_rand.1} parent=0 // pred_region
    _
  $region5: #{_dummy_rand.1} parent=0 // pred_fallthru
    _
  %v8 = vld [vmem:[%s0] sm:$0x1]
  %v9 = vshrl.u32 %v8, 9
  %v10 = vor.u32 %v9, 1065353216
  %v12 = vsub.f32 %v10, 1.0
  %13 = vst [vmem:[%s1] sm:$0x1] %v12
  // Predicated region
  $region6: #{_dummy_rand.1} parent=0 // pred_check
    _
  $region7: #{_dummy_rand.1} parent=0 // pred_check_branch
    %15 = sbr.rel (0) target = $region9
  $region8: #{_dummy_rand.1} parent=0 // pred_region
    _
  $region9: #{_dummy_rand.1} parent=0 // pred_fallthru
    _
  // Predicated region
  $region10: #{_dummy_rand.1} parent=0 // pred_check
    _
  $region11: #{_dummy_rand.1} parent=0 // pred_check_branch
    %17 = sbr.rel (0) target = $region13
  $region12: #{_dummy_rand.1} parent=0 // pred_region
    _
  $region13: #{_dummy_rand.1} parent=0 // pred_fallthru
    _

</llo_original>
